<compile_context>
chip_gen: v6e
topology: v6e:2x2x1
jax: 0.10.0
libtpu: 0.0.40
codegen_flags: <defaults>
</compile_context>

<pallas_src>
import functools

import jax
import jax.numpy as jnp
from jax.experimental import pallas as pl
from jax.experimental.pallas import tpu as pltpu


# ----------------------------------------------------------------------------
# Device / sizing helpers
# ----------------------------------------------------------------------------
def _vmem_capacity_bytes() -> int:
    """Physical per-core VMEM (128 MiB v5e/v6e, 64 MiB v7x). Conservative fallback."""
    try:
        cap = getattr(pltpu.get_tpu_info(), "vmem_capacity_bytes", None)
        if cap:
            return int(cap)
    except Exception:
        pass
    return 64 * 2**20


def _estimate_vmem(block_rows, block_cols, Hp, act_isz, wt_isz, out_isz):
    """Rough VMEM footprint of one pipelined grid step for the given tiles."""
    n_col = pl.cdiv(Hp, block_cols)
    wbuf = 1 if n_col == 1 else 2                       # weight buffer count
    weights = wbuf * (2 * Hp * block_cols + block_cols) * wt_isz
    acts = 2 * 2 * block_rows * Hp * act_isz            # x + res, double-buffered
    outs = 2 * block_rows * block_cols * out_isz        # output, double-buffered
    temps = 2 * block_rows * block_cols * 4             # f32 z / g temporaries
    return weights + acts + outs + temps


def _pick_tiles(N, Hp, act_isz, wt_isz, out_isz, tile_budget, block_rows_pref):
    """Prefer no column tiling (largest block_cols), then the tallest row tile."""
    row_cands = []
    for r in (block_rows_pref, 1024, 512, 256, 128, 64, 32, 16, 8):
        r = min(r, N)
        if r < N:
            r = max(8, (r // 8) * 8)                    # multiple of 8 unless full dim
        if r not in row_cands:
            row_cands.append(r)
    row_cands.sort(reverse=True)

    col_cands = [Hp]
    for c in (4096, 2048, 1024, 512, 256, 128):
        if c < Hp:
            col_cands.append(c)

    min_rows_first_pass = min(128, N)
    for rows_floor in (min_rows_first_pass, 8):
        for bc in col_cands:
            for br in row_cands:
                if br < rows_floor:
                    continue
                need = _estimate_vmem(br, bc, Hp, act_isz, wt_isz, out_isz)
                if need <= tile_budget:
                    return br, bc, need
    # Last resort: smallest tiles we allow.
    br = row_cands[-1]
    bc = 128 if Hp > 128 else Hp
    return br, bc, _estimate_vmem(br, bc, Hp, act_isz, wt_isz, out_isz)


# ----------------------------------------------------------------------------
# Kernel
# ----------------------------------------------------------------------------
def _gate_residue_kernel(x_ref, res_ref, wx_ref, wr_ref, b_ref, o_ref,
                         *, block_cols: int):
    x = x_ref[...]                       # (block_rows, Hp), native dtype
    r = res_ref[...]

    # Matmul inputs follow the folded-weight dtype (bf16 weights => bf16 MXU);
    # accumulation is always f32.
    wt_dtype = wx_ref.dtype
    xm = x if x.dtype == wt_dtype else x.astype(wt_dtype)
    rm = r if r.dtype == wt_dtype else r.astype(wt_dtype)

    z = jnp.dot(xm, wx_ref[...], preferred_element_type=jnp.float32)
    z = z + jnp.dot(rm, wr_ref[...], preferred_element_type=jnp.float32)
    z = z + b_ref[...].astype(jnp.float32)
    g = jax.nn.sigmoid(z)                # exp on the EUP slot; free under MXU/HBM bound

    Hp = x_ref.shape[-1]
    if block_cols == Hp:
        # No column tiling: epilogue uses the full-width tiles directly.
        xc, rc = x, r
    else:
        # Column tiling active (block_cols is a multiple of 128): the gate g
        # covers output columns [j*block_cols, ...); slice the matching
        # lane-aligned column window of x / res for the epilogue.
        j = pl.program_id(0)             # column axis is outermost
        c0 = pl.multiple_of(j * block_cols, block_cols)
        xc = x_ref[:, pl.ds(c0, block_cols)]
        rc = res_ref[:, pl.ds(c0, block_cols)]

    o_ref[...] = (xc.astype(jnp.float32) * g
                  + rc.astype(jnp.float32)).astype(o_ref.dtype)


# ----------------------------------------------------------------------------
# Parameter preprocessing (one-time, hoisted out of the forward path)
# ----------------------------------------------------------------------------
def prepare_gate_weights(weight, bias, matmul_dtype=None):
    """One-time preprocessing of the nn.Linear(3H, H) parameters.

    weight: [H, 3H] (PyTorch [out_features, in_features]); bias: [H].
    Returns (w_x, w_r, bias2d):
      w_x = (W1 + W3).T slab acting on x    -> [H, H]
      w_r = (W2 - W3).T slab acting on res  -> [H, H]
      bias2d = bias[None, :]                -> [1, H]
    Pass matmul_dtype=jnp.bfloat16 to store the slabs in bf16 (full MXU rate,
    half the weight HBM/VMEM); accumulation in the kernel stays f32.
    """
    H = weight.shape[0]
    w_t = weight.T                                   # [3H, H]
    w1, w2, w3 = w_t[:H], w_t[H:2 * H], w_t[2 * H:]
    w_x, w_r = w1 + w3, w2 - w3
    if matmul_dtype is not None:
        w_x = w_x.astype(matmul_dtype)
        w_r = w_r.astype(matmul_dtype)
    return w_x, w_r, bias.reshape(1, H)


def gate_residue_no_gate(x, res):
    """gate_flag=False branch of the PyTorch module: plain residual add."""
    return x + res


# ----------------------------------------------------------------------------
# Forward wrapper
# ----------------------------------------------------------------------------
def gate_residue(x, res, w_x, w_r, bias2d, *, block_rows=512,
                 vmem_limit_bytes=None):
    """Gated residual: out = x * sigmoid(x@w_x + res@w_r + b) + res.

    x, res: [..., H]; w_x, w_r: [H, H] from prepare_gate_weights; bias2d: [1, H].
    """
    orig_shape = x.shape
    H = orig_shape[-1]
    x2 = x.reshape(-1, H)
    r2 = res.reshape(-1, H)
    N = x2.shape[0]

    # Pad the feature axis to a lane boundary so output stores stay lane-dense.
    Hp = H if H % 128 == 0 else ((H + 127) // 128) * 128
    if Hp != H:
        pad = Hp - H
        x2 = jnp.pad(x2, ((0, 0), (0, pad)))
        r2 = jnp.pad(r2, ((0, 0), (0, pad)))
        w_x = jnp.pad(w_x, ((0, pad), (0, pad)))
        w_r = jnp.pad(w_r, ((0, pad), (0, pad)))
        bias2d = jnp.pad(bias2d, ((0, 0), (0, pad)))

    act_isz = jnp.dtype(x2.dtype).itemsize
    wt_isz = jnp.dtype(w_x.dtype).itemsize
    out_isz = jnp.dtype(x.dtype).itemsize

    capacity = _vmem_capacity_bytes()
    tile_budget = int(0.55 * capacity)

    block_rows, block_cols, need = _pick_tiles(
        N, Hp, act_isz, wt_isz, out_isz, tile_budget, block_rows)

    n_row = pl.cdiv(N, block_rows)
    n_col = pl.cdiv(Hp, block_cols)

    # v7x has 2 TensorCores: avoid a degenerate 1x1 grid so the "parallel" row
    # axis can be sharded across both cores (harmless extra step on v5e/v6e).
    if n_row == 1 and n_col == 1 and N >= 16:
        block_rows = max(8, ((pl.cdiv(N, 2) + 7) // 8) * 8)
        n_row = pl.cdiv(N, block_rows)

    # Weights: resident (single-buffered) when fetched exactly once; double
    # buffered when the column axis actually advances, so the slab DMA at a
    # column boundary (or every step when n_row == 1) is hidden.
    weight_buffers = 1 if n_col == 1 else 2

    if vmem_limit_bytes is None:
        vmem_limit_bytes = int(min(max(int(1.5 * need), 32 * 2**20),
                                   capacity - (8 << 20)))
        vmem_limit_bytes = max(vmem_limit_bytes, 16 << 20)

    kernel = functools.partial(_gate_residue_kernel, block_cols=block_cols)

    out2 = pl.pallas_call(
        kernel,
        out_shape=jax.ShapeDtypeStruct((N, Hp), x.dtype),
        grid_spec=pltpu.PrefetchScalarGridSpec(
            num_scalar_prefetch=0,
            # Columns outermost: big weight slabs change rarely; small row
            # tiles stream on the inner axis.
            grid=(n_col, n_row),
            in_specs=[
                pl.BlockSpec((block_rows, Hp), lambda j, i: (i, 0)),   # x rows
                pl.BlockSpec((block_rows, Hp), lambda j, i: (i, 0)),   # res rows
                pl.BlockSpec((Hp, block_cols), lambda j, i: (0, j),
                             pipeline_mode=pl.Buffered(weight_buffers)),  # W_x
                pl.BlockSpec((Hp, block_cols), lambda j, i: (0, j),
                             pipeline_mode=pl.Buffered(weight_buffers)),  # W_r
                pl.BlockSpec((1, block_cols), lambda j, i: (0, j),
                             pipeline_mode=pl.Buffered(weight_buffers)),  # bias
            ],
            out_specs=pl.BlockSpec((block_rows, block_cols),
                                   lambda j, i: (i, j)),
        ),
        compiler_params=pltpu.CompilerParams(
            dimension_semantics=("parallel", "parallel"),
            vmem_limit_bytes=vmem_limit_bytes,
        ),
    )(x2, r2, w_x, w_r, bias2d)

    if Hp != H:
        out2 = out2[:, :H]
    return out2.reshape(orig_shape)


# ----------------------------------------------------------------------------
# Reference + self-test
# ----------------------------------------------------------------------------
def gate_residue_ref(x, res, weight, bias):
    cat = jnp.concatenate([x, res, x - res], axis=-1)
    g = jax.nn.sigmoid(cat @ weight.T + bias)
    return x * g + res


def _run_case(key, batch, seq, hidden, in_dtype, matmul_dtype, atol, rtol, name):
    kx, kr, kw, kb = jax.random.split(key, 4)
    x = jax.random.normal(kx, (batch, seq, hidden), dtype=jnp.float32)
    res = jax.random.normal(kr, (batch, seq, hidden), dtype=jnp.float32)

    # nn.Linear(hidden*3, hidden): weight [hidden, 3*hidden], bias [hidden]
    bound = 1.0 / jnp.sqrt(hidden * 3.0)
    weight = jax.random.uniform(kw, (hidden, hidden * 3),
                                minval=-bound, maxval=bound, dtype=jnp.float32)
    bias = jax.random.uniform(kb, (hidden,),
                              minval=-bound, maxval=bound, dtype=jnp.float32)

    x_in = x.astype(in_dtype)
    r_in = res.astype(in_dtype)

    # One-time weight fold, hoisted out of the per-call forward path.
    w_x, w_r, b2d = jax.block_until_ready(
        prepare_gate_weights(weight, bias, matmul_dtype=matmul_dtype))

    out = jax.block_until_ready(gate_residue(x_in, r_in, w_x, w_r, b2d))

    # Reference in f32 from the (possibly quantized) inputs.
    ref = gate_residue_ref(x_in.astype(jnp.float32),
                           r_in.astype(jnp.float32), weight, bias)
    assert out.shape == (batch, seq, hidden), f"{name}: bad shape {out.shape}"
    assert jnp.allclose(out.astype(jnp.float32), ref, atol=atol, rtol=rtol), \
        f"{name}: mismatch vs reference"


if __name__ == "__main__":
    key = jax.random.PRNGKey(0)
    k1, k2, k3 = jax.random.split(key, 3)

    # f32, lane-dense hidden (128): tight tolerance (folded weights only
    # change rounding slightly vs the 3-block reference matmul).
    _run_case(k1, batch=2, seq=8, hidden=128, in_dtype=jnp.float32,
              matmul_dtype=None, atol=1e-4, rtol=1e-4, name="f32/h128")

    # bf16 inputs + bf16 folded weights (fast MXU path), loose tolerance.
    _run_case(k2, batch=2, seq=8, hidden=128, in_dtype=jnp.bfloat16,
              matmul_dtype=jnp.bfloat16, atol=6e-2, rtol=6e-2, name="bf16/h128")

    # Non-multiple-of-128 hidden: exercises the zero-pad lane-alignment path.
    _run_case(k3, batch=2, seq=8, hidden=96, in_dtype=jnp.float32,
              matmul_dtype=None, atol=1e-4, rtol=1e-4, name="f32/h96")

    print("KERNEL_OK")
</pallas_src>

<mosaic_0001>
module attributes {stable_mosaic.version = 11 : i64} {
  func.func @_gate_residue_kernel(%arg0: i32, %arg1: i32, %arg2: memref<8x128xf32, #tpu.memory_space<vmem>>, %arg3: memref<8x128xf32, #tpu.memory_space<vmem>>, %arg4: memref<128x128xf32, #tpu.memory_space<vmem>>, %arg5: memref<128x128xf32, #tpu.memory_space<vmem>>, %arg6: memref<1x128xf32, #tpu.memory_space<vmem>>, %arg7: memref<8x128xf32, #tpu.memory_space<vmem>>) attributes {dimension_semantics = [#tpu.dimension_semantics<parallel>, #tpu.dimension_semantics<parallel>], iteration_bounds = array<i64: 1, 2>, scalar_prefetch = 0 : i64, scratch_operands = 0 : i64, tpu.core_type = #tpu.core_type<tc>, window_params = [{transform_indices = @transform_0, window_bounds = array<i64: 8, 128>}, {transform_indices = @transform_1, window_bounds = array<i64: 8, 128>}, {pipeline_mode = #tpu.pipeline_mode<synchronous>, transform_indices = @transform_2, window_bounds = array<i64: 128, 128>}, {pipeline_mode = #tpu.pipeline_mode<synchronous>, transform_indices = @transform_3, window_bounds = array<i64: 128, 128>}, {pipeline_mode = #tpu.pipeline_mode<synchronous>, transform_indices = @transform_4, window_bounds = array<i64: 1, 128>}, {transform_indices = @transform_5, window_bounds = array<i64: 8, 128>}]} {
    %c0 = arith.constant 0 : index
    %c0_0 = arith.constant 0 : index
    %0 = vector.load %arg2[%c0, %c0_0] : memref<8x128xf32, #tpu.memory_space<vmem>>, vector<8x128xf32>
    %c0_1 = arith.constant 0 : index
    %c0_2 = arith.constant 0 : index
    %1 = vector.load %arg3[%c0_1, %c0_2] : memref<8x128xf32, #tpu.memory_space<vmem>>, vector<8x128xf32>
    %c0_3 = arith.constant 0 : index
    %c0_4 = arith.constant 0 : index
    %2 = vector.load %arg4[%c0_3, %c0_4] : memref<128x128xf32, #tpu.memory_space<vmem>>, vector<128x128xf32>
    %cst = arith.constant dense<0.000000e+00> : vector<8x128xf32>
    %3 = tpu.matmul %0, %2, %cst {dimension_numbers = #tpu.dot_dimension_numbers<[1], [0], [0], [1], [0, 0, 1, 1], [], []>} : vector<8x128xf32>, vector<128x128xf32>, vector<8x128xf32> -> vector<8x128xf32>
    %c0_5 = arith.constant 0 : index
    %c0_6 = arith.constant 0 : index
    %4 = vector.load %arg5[%c0_5, %c0_6] : memref<128x128xf32, #tpu.memory_space<vmem>>, vector<128x128xf32>
    %cst_7 = arith.constant dense<0.000000e+00> : vector<8x128xf32>
    %5 = tpu.matmul %1, %4, %cst_7 {dimension_numbers = #tpu.dot_dimension_numbers<[1], [0], [0], [1], [0, 0, 1, 1], [], []>} : vector<8x128xf32>, vector<128x128xf32>, vector<8x128xf32> -> vector<8x128xf32>
    %6 = arith.addf %3, %5 : vector<8x128xf32>
    %c0_8 = arith.constant 0 : index
    %c0_9 = arith.constant 0 : index
    %7 = vector.load %arg6[%c0_8, %c0_9] : memref<1x128xf32, #tpu.memory_space<vmem>>, vector<1x128xf32>
    %8 = vector.broadcast %7 : vector<1x128xf32> to vector<8x128xf32>
    %9 = arith.addf %6, %8 : vector<8x128xf32>
    %10 = arith.negf %9 : vector<8x128xf32>
    %11 = math.exp %10 : vector<8x128xf32>
    %cst_10 = arith.constant 1.000000e+00 : f32
    %12 = vector.broadcast %cst_10 : f32 to vector<8x128xf32>
    %13 = arith.addf %12, %11 : vector<8x128xf32>
    %14 = arith.divf %12, %13 : vector<8x128xf32>
    %15 = arith.mulf %0, %14 : vector<8x128xf32>
    %16 = arith.addf %15, %1 : vector<8x128xf32>
    %c0_11 = arith.constant 0 : index
    %c0_12 = arith.constant 0 : index
    %17 = vector.load %arg7[%c0_11, %c0_12] : memref<8x128xf32, #tpu.memory_space<vmem>>, vector<8x128xf32>
    tpu.vector_store %arg7[%c0_11, %c0_12], %16 {strides = array<i32>} : memref<8x128xf32, #tpu.memory_space<vmem>>, vector<8x128xf32>,
    return
  }
  func.func @transform_0(%arg0: i32, %arg1: i32) -> (i32, i32) {
    %c0_i32 = arith.constant 0 : i32
    %c0_i32_0 = arith.constant 0 : i32
    return %arg1, %c0_i32 : i32, i32
  }
  func.func @transform_1(%arg0: i32, %arg1: i32) -> (i32, i32) {
    %c0_i32 = arith.constant 0 : i32
    %c0_i32_0 = arith.constant 0 : i32
    return %arg1, %c0_i32 : i32, i32
  }
  func.func @transform_2(%arg0: i32, %arg1: i32) -> (i32, i32) {
    %c0_i32 = arith.constant 0 : i32
    %c0_i32_0 = arith.constant 0 : i32
    return %c0_i32, %arg0 : i32, i32
  }
  func.func @transform_3(%arg0: i32, %arg1: i32) -> (i32, i32) {
    %c0_i32 = arith.constant 0 : i32
    %c0_i32_0 = arith.constant 0 : i32
    return %c0_i32, %arg0 : i32, i32
  }
  func.func @transform_4(%arg0: i32, %arg1: i32) -> (i32, i32) {
    %c0_i32 = arith.constant 0 : i32
    %c0_i32_0 = arith.constant 0 : i32
    return %c0_i32, %arg0 : i32, i32
  }
  func.func @transform_5(%arg0: i32, %arg1: i32) -> (i32, i32) {
    %c0_i32 = arith.constant 0 : i32
    return %arg1, %arg0 : i32, i32
  }
}

</mosaic_0001>

<llo_original>
// kernel: tpu_custom_call.1
$region0: #{tpu_custom_call.1}
  #allocation0 [shape = 'u32[]', space=smem, size = 0x4, offset = 0x4, fixed_abs, tag = 'smem constant byte address 0x4 - core index']
  #allocation1 [shape = 'u32[144,128]{1,0:T(1,128)}', space=vmem, size = 0x12000, scoped, tag = 'internal scratch']
  %s0 = inlined_call_operand.hbm [shape: f32[16,128], index: 0, kind: input, shape index: {}]
  %s1 = inlined_call_operand.hbm [shape: f32[16,128], index: 1, kind: input, shape index: {}]
  %s2 = inlined_call_operand.hbm [shape: f32[128,128], index: 2, kind: input, shape index: {}]
  %s3 = inlined_call_operand.hbm [shape: f32[128,128], index: 3, kind: input, shape index: {}]
  %s4 = inlined_call_operand.vmem [shape: f32[1,128], index: 4, kind: input, shape index: {}]
  %s5 = inlined_call_operand.hbm [shape: f32[16,128], index: 5, kind: output, shape index: {}]
  %s6 = sld [smem:[#allocation0]]
  $region69: #{tpu_custom_call.1} parent=0
    _
  %s8 = ssub.s32 1, %s6
  %s9 = scalar_select 0, %s8, %s6
  $region1: #{tpu_custom_call.1} parent=0
    #allocation2 [shape = 'u8[8192]{0}', space=vmem, size = 0x2000, scoped, tag = 'input window, operand 0']
    #allocation3 [shape = 's32[2]{0}', space=sflag, size = 0x8, scoped, tag = 'scoped memory for tpu_custom_call.1']
    #allocation4 [shape = 's32[2]{0}', space=sflag, size = 0x8, scoped, tag = 'scoped memory for tpu_custom_call.1']
    #allocation5 [shape = 'u8[8192]{0}', space=vmem, size = 0x2000, scoped, tag = 'input window, operand 1']
    #allocation6 [shape = 's32[2]{0}', space=sflag, size = 0x8, scoped, tag = 'scoped memory for tpu_custom_call.1']
    #allocation7 [shape = 'u8[65536]{0}', space=vmem, size = 0x10000, scoped, tag = 'input window, operand 2, single buffered']
    #allocation8 [shape = 'u8[65536]{0}', space=vmem, size = 0x10000, scoped, tag = 'input window, operand 3, single buffered']
    #allocation9 [shape = 's32[1]{0}', space=sflag, size = 0x4, scoped, tag = 'scoped memory for tpu_custom_call.1']
    #allocation10 [shape = 'u8[8192]{0}', space=vmem, size = 0x2000, scoped, tag = 'output window, operand 0']
    %10 = vsyncpa [#allocation3], 0
    %s11 = scalar_lea.sflag [#allocation3], 1
    %12 = vsyncpa %s11, 0
    %13 = vsyncpa [#allocation6], 0
    %s14 = scalar_lea.sflag [#allocation6], 1
    %15 = vsyncpa %s14, 0
    %16 = vsyncpa [#allocation9], 0
    %17 = vsyncpa [#allocation4], 0
    %s18 = scalar_lea.sflag [#allocation4], 1
    %19 = vsyncpa %s18, 0
    loop: start=0, step=1, limit=4
    $region2: #{tpu_custom_call.1} parent=1 // loop_pre_header
      _
    $region3: #{tpu_custom_call.1} parent=1 // loop_header
      %s21 = sphi 0, %s25
      %p22 = scmp.ge.s32.totalorder %s21, 4
      %s28 = sphi 0, %s40
      %s29 = sphi 0, %s36
      %s30 = sphi 0, %s28
      %s31 = sphi 0, %s29
      %s32 = sphi 0, %s30
      %s33 = sphi 0, %s31
      %s43 = sphi 0, %s45
      %s46 = sphi 0, %s43
      %s47 = sphi 0, %s46
      %s63 = sphi 0, %s47
      %s69 = sphi 0, %s71
      %s72 = sphi 0, %s69
      %s73 = sphi 0, %s72
      %s89 = sphi 0, %s73
      %s95 = sphi 0, %s97
      %s98 = sphi 0, %s95
      %s99 = sphi 0, %s98
      %s115 = sphi 0, %s99
      %s121 = sphi 0, %s123
      %s124 = sphi 0, %s121
      %s125 = sphi 0, %s124
      %s141 = sphi 0, %s125
      %s147 = sphi 0, %s149
      %s150 = sphi 0, %s147
      %s151 = sphi 0, %s150
      %s167 = sphi 0, %s151
      %s175 = sphi 0, %s177
      %s178 = sphi 0, %s175
      %s179 = sphi 0, %s178
      %s195 = sphi 0, %s179
    $region4: #{tpu_custom_call.1} parent=1 // loop_header_branch
      %24 = sbr.rel (%p22) target = $region8
    $region5: #{tpu_custom_call.1} parent=1 // loop_body
      %s26 = ssub.s32 %s21, 1
      %s27 = ssub.s32 %s21, 2
      %s34 = sadd.s32 1, %s29
      %p35 = scmp.ge.s32.totalorder %s34, 2
      %s36 = scalar_select %p35, 0, %s34
      %s37 = sadd.s32 1, %s28
      %s38 = scalar_select %p35, %s37, %s28
      %p39 = scmp.ge.s32.totalorder %s38, 1
      %s40 = scalar_select %p39, 0, %s38
      %s41 = ssub.s32 %s29, %s36
      %p42 = scmp.eq.s32.totalorder %s41, 0
      %s44 = sadd.s32 %s43, 1
      %s45 = scalar_select %p42, %s43, %s44
      %p48 = pneg %p42
      %p49 = scmp.eq.s32.totalorder %s21, 1
      %p50 = por %p48, %p49
      %p51 = scmp.ne.s32.totalorder %s43, %s46
      %p52 = scmp.eq.s32.totalorder %s21, 0
      %p53 = por %p51, %p52
      %p54 = scmp.ne.s32.totalorder %s43, %s46
      %p55 = scmp.eq.s32.totalorder %s26, 1
      %p56 = por %p54, %p55
      %p57 = scmp.ne.s32.totalorder %s46, %s47
      %p58 = scmp.eq.s32.totalorder %s26, 0
      %p59 = por %p57, %p58
      %p60 = scmp.ne.s32.totalorder %s46, %s47
      %p61 = scmp.eq.s32.totalorder %s27, 1
      %p62 = por %p60, %p61
      %p64 = scmp.ne.s32.totalorder %s47, %s63
      %p65 = scmp.eq.s32.totalorder %s27, 0
      %p66 = por %p64, %p65
      %s67 = ssub.s32 %s29, %s36
      %p68 = scmp.eq.s32.totalorder %s67, 0
      %s70 = sadd.s32 %s69, 1
      %s71 = scalar_select %p68, %s69, %s70
      %p74 = pneg %p68
      %p75 = scmp.eq.s32.totalorder %s21, 1
      %p76 = por %p74, %p75
      %p77 = scmp.ne.s32.totalorder %s69, %s72
      %p78 = scmp.eq.s32.totalorder %s21, 0
      %p79 = por %p77, %p78
      %p80 = scmp.ne.s32.totalorder %s69, %s72
      %p81 = scmp.eq.s32.totalorder %s26, 1
      %p82 = por %p80, %p81
      %p83 = scmp.ne.s32.totalorder %s72, %s73
      %p84 = scmp.eq.s32.totalorder %s26, 0
      %p85 = por %p83, %p84
      %p86 = scmp.ne.s32.totalorder %s72, %s73
      %p87 = scmp.eq.s32.totalorder %s27, 1
      %p88 = por %p86, %p87
      %p90 = scmp.ne.s32.totalorder %s73, %s89
      %p91 = scmp.eq.s32.totalorder %s27, 0
      %p92 = por %p90, %p91
      %s93 = ssub.s32 %s28, %s40
      %p94 = scmp.eq.s32.totalorder %s93, 0
      %s96 = sadd.s32 %s95, 1
      %s97 = scalar_select %p94, %s95, %s96
      %p100 = pneg %p94
      %p101 = scmp.eq.s32.totalorder %s21, 1
      %p102 = por %p100, %p101
      %p103 = scmp.ne.s32.totalorder %s95, %s98
      %p104 = scmp.eq.s32.totalorder %s21, 0
      %p105 = por %p103, %p104
      %p106 = scmp.ne.s32.totalorder %s95, %s98
      %p107 = scmp.eq.s32.totalorder %s26, 1
      %p108 = por %p106, %p107
      %p109 = scmp.ne.s32.totalorder %s98, %s99
      %p110 = scmp.eq.s32.totalorder %s26, 0
      %p111 = por %p109, %p110
      %p112 = scmp.ne.s32.totalorder %s98, %s99
      %p113 = scmp.eq.s32.totalorder %s27, 1
      %p114 = por %p112, %p113
      %p116 = scmp.ne.s32.totalorder %s99, %s115
      %p117 = scmp.eq.s32.totalorder %s27, 0
      %p118 = por %p116, %p117
      %s119 = ssub.s32 %s28, %s40
      %p120 = scmp.eq.s32.totalorder %s119, 0
      %s122 = sadd.s32 %s121, 1
      %s123 = scalar_select %p120, %s121, %s122
      %p126 = pneg %p120
      %p127 = scmp.eq.s32.totalorder %s21, 1
      %p128 = por %p126, %p127
      %p129 = scmp.ne.s32.totalorder %s121, %s124
      %p130 = scmp.eq.s32.totalorder %s21, 0
      %p131 = por %p129, %p130
      %p132 = scmp.ne.s32.totalorder %s121, %s124
      %p133 = scmp.eq.s32.totalorder %s26, 1
      %p134 = por %p132, %p133
      %p135 = scmp.ne.s32.totalorder %s124, %s125
      %p136 = scmp.eq.s32.totalorder %s26, 0
      %p137 = por %p135, %p136
      %p138 = scmp.ne.s32.totalorder %s124, %s125
      %p139 = scmp.eq.s32.totalorder %s27, 1
      %p140 = por %p138, %p139
      %p142 = scmp.ne.s32.totalorder %s125, %s141
      %p143 = scmp.eq.s32.totalorder %s27, 0
      %p144 = por %p142, %p143
      %s145 = ssub.s32 %s28, %s40
      %p146 = scmp.eq.s32.totalorder %s145, 0
      %s148 = sadd.s32 %s147, 1
      %s149 = scalar_select %p146, %s147, %s148
      %p152 = pneg %p146
      %p153 = scmp.eq.s32.totalorder %s21, 1
      %p154 = por %p152, %p153
      %p155 = scmp.ne.s32.totalorder %s147, %s150
      %p156 = scmp.eq.s32.totalorder %s21, 0
      %p157 = por %p155, %p156
      %p158 = scmp.ne.s32.totalorder %s147, %s150
      %p159 = scmp.eq.s32.totalorder %s26, 1
      %p160 = por %p158, %p159
      %p161 = scmp.ne.s32.totalorder %s150, %s151
      %p162 = scmp.eq.s32.totalorder %s26, 0
      %p163 = por %p161, %p162
      %p164 = scmp.ne.s32.totalorder %s150, %s151
      %p165 = scmp.eq.s32.totalorder %s27, 1
      %p166 = por %p164, %p165
      %p168 = scmp.ne.s32.totalorder %s151, %s167
      %p169 = scmp.eq.s32.totalorder %s27, 0
      %p170 = por %p168, %p169
      %s171 = ssub.s32 %s29, %s36
      %s172 = ssub.s32 %s28, %s40
      %s173 = sor.u32 %s171, %s172
      %p174 = scmp.eq.s32.totalorder %s173, 0
      %s176 = sadd.s32 %s175, 1
      %s177 = scalar_select %p174, %s175, %s176
      %p180 = pneg %p174
      %p181 = scmp.eq.s32.totalorder %s21, 1
      %p182 = por %p180, %p181
      %p183 = scmp.ne.s32.totalorder %s175, %s178
      %p184 = scmp.eq.s32.totalorder %s21, 0
      %p185 = por %p183, %p184
      %p186 = scmp.ne.s32.totalorder %s175, %s178
      %p187 = scmp.eq.s32.totalorder %s26, 1
      %p188 = por %p186, %p187
      %p189 = scmp.ne.s32.totalorder %s178, %s179
      %p190 = scmp.eq.s32.totalorder %s26, 0
      %p191 = por %p189, %p190
      %p192 = scmp.ne.s32.totalorder %s178, %s179
      %p193 = scmp.eq.s32.totalorder %s27, 1
      %p194 = por %p192, %p193
      %p196 = scmp.ne.s32.totalorder %s179, %s195
      %p197 = scmp.eq.s32.totalorder %s27, 0
      %p198 = por %p196, %p197
      %p199 = scmp.le.s32.totalorder 1, %s21
      %p200 = scmp.lt.s32.totalorder %s21, 3
      %p201 = pnand %p199, %p200
      %p202 = pneg %p201
      // Predicated region
      $region9: #{tpu_custom_call.1} parent=5 // pred_check
        _
      $region10: #{tpu_custom_call.1} parent=5 // pred_check_branch
        %204 = sbr.rel (%p201) target = $region12
      $region11: #{tpu_custom_call.1} parent=5 // pred_region
        %s205 = ssub.s32 %s21, 1
        // Predicated region
        $region13: #{tpu_custom_call.1} parent=11 // pred_check
          %p206 = pneg %p111
        $region14: #{tpu_custom_call.1} parent=11 // pred_check_branch
          %208 = sbr.rel (%p206) target = $region16
        $region15: #{tpu_custom_call.1} parent=11 // pred_region
          %s210 = ssub.s32 2048, 2048
          %211 = vsyncadd [#allocation6], %s210
          %s212 = smul.addr %s30, 128
          %s213 = scalar_lea.hbm %s2, %s212
          %s214 = sshll.u32 [#allocation7], 4
          %s215 = int_to_ptr.vmem [resolvable:$true] %s214
          %220 = dma.hbm_to_vmem [thread:$0]  %s213, 2048, %s215, [#allocation6], 128, 128, 8
        $region16: #{tpu_custom_call.1} parent=11 // pred_fallthru
          _
        // Predicated region
        $region17: #{tpu_custom_call.1} parent=11 // pred_check
          %p221 = pneg %p137
        $region18: #{tpu_custom_call.1} parent=11 // pred_check_branch
          %223 = sbr.rel (%p221) target = $region20
        $region19: #{tpu_custom_call.1} parent=11 // pred_region
          %s225 = ssub.s32 2048, 2048
          %226 = vsyncadd [#allocation9], %s225
          %s227 = smul.addr %s30, 128
          %s228 = scalar_lea.hbm %s3, %s227
          %s229 = sshll.u32 [#allocation8], 4
          %s230 = int_to_ptr.vmem [resolvable:$true] %s229
          %235 = dma.hbm_to_vmem [thread:$0]  %s228, 2048, %s230, [#allocation9], 128, 128, 8
        $region20: #{tpu_custom_call.1} parent=11 // pred_fallthru
          _
        // Predicated region
        $region21: #{tpu_custom_call.1} parent=11 // pred_check
          %p236 = pneg %p163
        $region22: #{tpu_custom_call.1} parent=11 // pred_check_branch
          %238 = sbr.rel (%p236) target = $region24
        $region23: #{tpu_custom_call.1} parent=11 // pred_region
          %p239 = scmp.lt.s32.totalorder %s30, 0
          %s240 = scalar_select %p239, %s30, 0
          %s241 = scalar_lea.vmem %s4, %s240
        $region24: #{tpu_custom_call.1} parent=11 // pred_fallthru
          _
      $region12: #{tpu_custom_call.1} parent=5 // pred_fallthru
        _
      %p242 = scmp.lt.s32.totalorder %s21, 2
      // Predicated region
      $region25: #{tpu_custom_call.1} parent=5 // pred_check
        %p243 = pneg %p242
      $region26: #{tpu_custom_call.1} parent=5 // pred_check_branch
        %245 = sbr.rel (%p243) target = $region28
      $region27: #{tpu_custom_call.1} parent=5 // pred_region
        // Predicated region
        $region29: #{tpu_custom_call.1} parent=27 // pred_check
          %p246 = pneg %p53
        $region30: #{tpu_custom_call.1} parent=27 // pred_check_branch
          %248 = sbr.rel (%p246) target = $region32
        $region31: #{tpu_custom_call.1} parent=27 // pred_region
          %s249 = sand.u32 %s43, 1
          %s250 = scalar_lea.sflag [#allocation3], %s249
          %s251 = sand.u32 %s43, 1
          %s252 = smul.addr %s251, 8
          %s253 = scalar_lea.vmem [#allocation2], %s252
          %s255 = ssub.s32 128, 128
          %256 = vsyncadd %s250, %s255
          %s257 = smul.addr %s29, 128
          %s258 = scalar_lea.hbm %s0, %s257
          %s260 = sshll.u32 %s253, 4
          %s261 = int_to_ptr.vmem [resolvable:$true] %s260
          %263 = dma.hbm_to_vmem [thread:$0]  %s258, 128, %s261, %s250
        $region32: #{tpu_custom_call.1} parent=27 // pred_fallthru
          _
        // Predicated region
        $region33: #{tpu_custom_call.1} parent=27 // pred_check
          %p264 = pneg %p79
        $region34: #{tpu_custom_call.1} parent=27 // pred_check_branch
          %266 = sbr.rel (%p264) target = $region36
        $region35: #{tpu_custom_call.1} parent=27 // pred_region
          %s267 = sand.u32 %s21, 1
          %s268 = scalar_lea.sflag [#allocation6], %s267
          %s269 = sand.u32 %s69, 1
          %s270 = smul.addr %s269, 8
          %s271 = scalar_lea.vmem [#allocation5], %s270
          %s273 = ssub.s32 128, 128
          %274 = vsyncadd %s268, %s273
          %s275 = smul.addr %s29, 128
          %s276 = scalar_lea.hbm %s1, %s275
          %s278 = sshll.u32 %s271, 4
          %s279 = int_to_ptr.vmem [resolvable:$true] %s278
          %281 = dma.hbm_to_vmem [thread:$0]  %s276, 128, %s279, %s268
        $region36: #{tpu_custom_call.1} parent=27 // pred_fallthru
          _
      $region28: #{tpu_custom_call.1} parent=5 // pred_fallthru
        _
      %p282 = scmp.le.s32.totalorder 1, %s21
      %p283 = scmp.lt.s32.totalorder %s21, 3
      %p284 = pnand %p282, %p283
      %p285 = pneg %p284
      // Predicated region
      $region37: #{tpu_custom_call.1} parent=5 // pred_check
        _
      $region38: #{tpu_custom_call.1} parent=5 // pred_check_branch
        %287 = sbr.rel (%p284) target = $region40
      $region39: #{tpu_custom_call.1} parent=5 // pred_region
        %s288 = ssub.s32 %s21, 1
        %s289 = sand.u32 %s46, 1
        %s290 = scalar_lea.sflag [#allocation3], %s289
        %s291 = sand.u32 %s46, 1
        %s292 = smul.addr %s291, 8
        %s293 = scalar_lea.vmem [#allocation2], %s292
        // Predicated region
        $region41: #{tpu_custom_call.1} parent=39 // pred_check
          %p294 = pneg %p59
        $region42: #{tpu_custom_call.1} parent=39 // pred_check_branch
          %296 = sbr.rel (%p294) target = $region44
        $region43: #{tpu_custom_call.1} parent=39 // pred_region
          %297 = dma.done %s290, 128
        $region44: #{tpu_custom_call.1} parent=39 // pred_fallthru
          _
        %s298 = sand.u32 %s26, 1
        %s299 = scalar_lea.sflag [#allocation6], %s298
        %s300 = sand.u32 %s72, 1
        %s301 = smul.addr %s300, 8
        %s302 = scalar_lea.vmem [#allocation5], %s301
        // Predicated region
        $region45: #{tpu_custom_call.1} parent=39 // pred_check
          %p303 = pneg %p85
        $region46: #{tpu_custom_call.1} parent=39 // pred_check_branch
          %305 = sbr.rel (%p303) target = $region48
        $region47: #{tpu_custom_call.1} parent=39 // pred_region
          %306 = dma.done %s299, 128
        $region48: #{tpu_custom_call.1} parent=39 // pred_fallthru
          _
        // Predicated region
        $region49: #{tpu_custom_call.1} parent=39 // pred_check
          %p307 = pneg %p111
        $region50: #{tpu_custom_call.1} parent=39 // pred_check_branch
          %309 = sbr.rel (%p307) target = $region52
        $region51: #{tpu_custom_call.1} parent=39 // pred_region
          %310 = dma.done [#allocation6], 2048
        $region52: #{tpu_custom_call.1} parent=39 // pred_fallthru
          _
        // Predicated region
        $region53: #{tpu_custom_call.1} parent=39 // pred_check
          %p311 = pneg %p137
        $region54: #{tpu_custom_call.1} parent=39 // pred_check_branch
          %313 = sbr.rel (%p311) target = $region56
        $region55: #{tpu_custom_call.1} parent=39 // pred_region
          %314 = dma.done [#allocation9], 2048
        $region56: #{tpu_custom_call.1} parent=39 // pred_fallthru
          _
        %s315 = sand.u32 %s46, 1
        %s316 = scalar_lea.sflag [#allocation3], %s315
        %s317 = sand.u32 %s46, 1
        %s318 = smul.addr %s317, 8
        %s319 = scalar_lea.vmem [#allocation2], %s318
        %p320 = pneg %p59
        %p321 = pneg %p56
        %s322 = sand.u32 %s26, 1
        %s323 = scalar_lea.sflag [#allocation6], %s322
        %s324 = sand.u32 %s72, 1
        %s325 = smul.addr %s324, 8
        %s326 = scalar_lea.vmem [#allocation5], %s325
        %p327 = pneg %p85
        %p328 = pneg %p82
        %p329 = pneg %p111
        %p330 = pneg %p108
        %p331 = pneg %p137
        %p332 = pneg %p134
        %p333 = scmp.lt.s32.totalorder %s30, 0
        %s334 = scalar_select %p333, %s30, 0
        %s335 = scalar_lea.vmem %s4, %s334
        %p336 = pneg %p163
        %p337 = pneg %p160
        %p338 = pneg %p191
        %p339 = pneg %p188
        %s340 = sand.u32 %s178, 1
        %s341 = scalar_lea.sflag [#allocation4], %s340
        %s342 = sand.u32 %s178, 1
        %s343 = smul.addr %s342, 8
        %s344 = scalar_lea.vmem [#allocation10], %s343
        %p345 = scmp.lt.s32.totalorder %s30, 0
        %s346 = scalar_select %p345, %s30, 0
        %s347 = scalar_lea.vmem %s4, %s346
        %v348 = vld [vmem:[%s293] sm:$0xff]
        %v349 = vld [vmem:[%s302] sm:$0xff]
        %v350 = vld [vmem:[#allocation7] sm:$0xff]
        %v351 = vld [vmem:[#allocation7 + $0x8] sm:$0xff]
        %v352 = vld [vmem:[#allocation7 + $0x10] sm:$0xff]
        %v353 = vld [vmem:[#allocation7 + $0x18] sm:$0xff]
        %v354 = vld [vmem:[#allocation7 + $0x20] sm:$0xff]
        %v355 = vld [vmem:[#allocation7 + $0x28] sm:$0xff]
        %v356 = vld [vmem:[#allocation7 + $0x30] sm:$0xff]
        %v357 = vld [vmem:[#allocation7 + $0x38] sm:$0xff]
        %v358 = vld [vmem:[#allocation7 + $0x40] sm:$0xff]
        %v359 = vld [vmem:[#allocation7 + $0x48] sm:$0xff]
        %v360 = vld [vmem:[#allocation7 + $0x50] sm:$0xff]
        %v361 = vld [vmem:[#allocation7 + $0x58] sm:$0xff]
        %v362 = vld [vmem:[#allocation7 + $0x60] sm:$0xff]
        %v363 = vld [vmem:[#allocation7 + $0x68] sm:$0xff]
        %v364 = vld [vmem:[#allocation7 + $0x70] sm:$0xff]
        %v365 = vld [vmem:[#allocation7 + $0x78] sm:$0xff]
        %v366 = vld [vmem:[#allocation8] sm:$0xff]
        %v367 = vld [vmem:[#allocation8 + $0x8] sm:$0xff]
        %v368 = vld [vmem:[#allocation8 + $0x10] sm:$0xff]
        %v369 = vld [vmem:[#allocation8 + $0x18] sm:$0xff]
        %v370 = vld [vmem:[#allocation8 + $0x20] sm:$0xff]
        %v371 = vld [vmem:[#allocation8 + $0x28] sm:$0xff]
        %v372 = vld [vmem:[#allocation8 + $0x30] sm:$0xff]
        %v373 = vld [vmem:[#allocation8 + $0x38] sm:$0xff]
        %v374 = vld [vmem:[#allocation8 + $0x40] sm:$0xff]
        %v375 = vld [vmem:[#allocation8 + $0x48] sm:$0xff]
        %v376 = vld [vmem:[#allocation8 + $0x50] sm:$0xff]
        %v377 = vld [vmem:[#allocation8 + $0x58] sm:$0xff]
        %v378 = vld [vmem:[#allocation8 + $0x60] sm:$0xff]
        %v379 = vld [vmem:[#allocation8 + $0x68] sm:$0xff]
        %v380 = vld [vmem:[#allocation8 + $0x70] sm:$0xff]
        %v381 = vld [vmem:[#allocation8 + $0x78] sm:$0xff]
        %382 = vmatprep.subr.mxu0 0.0
        %383 = vmatpush1.msra.mxu0 %v381
        %384 = vmatprep.subr.mxu0 0.0
        %385 = vmatpush1.msra.mxu0 %v380
        %386 = vmatprep.subr.mxu0 0.0
        %387 = vmatpush1.msra.mxu0 %v379
        %388 = vmatprep.subr.mxu0 0.0
        %389 = vmatpush1.msra.mxu0 %v378
        %390 = vmatprep.subr.mxu0 0.0
        %391 = vmatpush1.msra.mxu0 %v377
        %392 = vmatprep.subr.mxu0 0.0
        %393 = vmatpush1.msra.mxu0 %v376
        %394 = vmatprep.subr.mxu0 0.0
        %395 = vmatpush1.msra.mxu0 %v375
        %396 = vmatprep.subr.mxu0 0.0
        %397 = vmatpush1.msra.mxu0 %v374
        %398 = vmatprep.subr.mxu0 0.0
        %399 = vmatpush1.msra.mxu0 %v373
        %400 = vmatprep.subr.mxu0 0.0
        %401 = vmatpush1.msra.mxu0 %v372
        %402 = vmatprep.subr.mxu0 0.0
        %403 = vmatpush1.msra.mxu0 %v371
        %404 = vmatprep.subr.mxu0 0.0
        %405 = vmatpush1.msra.mxu0 %v370
        %406 = vmatprep.subr.mxu0 0.0
        %407 = vmatpush1.msra.mxu0 %v369
        %408 = vmatprep.subr.mxu0 0.0
        %409 = vmatpush1.msra.mxu0 %v368
        %410 = vmatprep.subr.mxu0 0.0
        %411 = vmatpush1.msra.mxu0 %v367
        %412 = vmatprep.subr.mxu0 0.0
        %413 = vmatpush1.msra.mxu0 %v366
        %414 = vmatprep.subr.mxu0 0.0
        %415 = vmatpush2.msra.mxu0 0.0
        %416 = vmatprep.subr.mxu0 0.0
        %417 = vmatpush2.msra.mxu0 0.0
        %418 = vmatprep.subr.mxu0 0.0
        %419 = vmatpush2.msra.mxu0 0.0
        %420 = vmatprep.subr.mxu0 0.0
        %421 = vmatpush2.msra.mxu0 0.0
        %422 = vmatprep.subr.mxu0 0.0
        %423 = vmatpush2.msra.mxu0 0.0
        %424 = vmatprep.subr.mxu0 0.0
        %425 = vmatpush2.msra.mxu0 0.0
        %426 = vmatprep.subr.mxu0 0.0
        %427 = vmatpush2.msra.mxu0 0.0
        %428 = vmatprep.subr.mxu0 0.0
        %429 = vmatpush2.msra.mxu0 0.0
        %430 = vmatprep.subr.mxu0 0.0
        %431 = vmatpush2.msra.mxu0 0.0
        %432 = vmatprep.subr.mxu0 0.0
        %433 = vmatpush2.msra.mxu0 0.0
        %434 = vmatprep.subr.mxu0 0.0
        %435 = vmatpush2.msra.mxu0 0.0
        %436 = vmatprep.subr.mxu0 0.0
        %437 = vmatpush2.msra.mxu0 0.0
        %438 = vmatprep.subr.mxu0 0.0
        %439 = vmatpush2.msra.mxu0 0.0
        %440 = vmatprep.subr.mxu0 0.0
        %441 = vmatpush2.msra.mxu0 0.0
        %442 = vmatprep.subr.mxu0 0.0
        %443 = vmatpush2.msra.mxu0 0.0
        %444 = vmatprep.subr.mxu0 0.0
        %445 = vmatpush2.msra.mxu0 0.0
        %446 = vmatprep.mubr.f32.mxu0 0.0
        %447 = vmatmul.mubr.f32.gmra.mxu0 %v349
        %v448 = vpop.f32.mrf.mxu0
        %v449 = vadd.f32 0.0, %v448
        %v450 = vpop.f32.mrf.mxu0
        %451 = vdwg.mxu0
        %452 = vmatprep.subr.mxu0 0.0
        %453 = vmatpush1.msra.mxu0 %v365
        %454 = vmatprep.subr.mxu0 0.0
        %455 = vmatpush1.msra.mxu0 %v364
        %456 = vmatprep.subr.mxu0 0.0
        %457 = vmatpush1.msra.mxu0 %v363
        %458 = vmatprep.subr.mxu0 0.0
        %459 = vmatpush1.msra.mxu0 %v362
        %460 = vmatprep.subr.mxu0 0.0
        %461 = vmatpush1.msra.mxu0 %v361
        %462 = vmatprep.subr.mxu0 0.0
        %463 = vmatpush1.msra.mxu0 %v360
        %464 = vmatprep.subr.mxu0 0.0
        %465 = vmatpush1.msra.mxu0 %v359
        %466 = vmatprep.subr.mxu0 0.0
        %467 = vmatpush1.msra.mxu0 %v358
        %468 = vmatprep.subr.mxu0 0.0
        %469 = vmatpush1.msra.mxu0 %v357
        %470 = vmatprep.subr.mxu0 0.0
        %471 = vmatpush1.msra.mxu0 %v356
        %472 = vmatprep.subr.mxu0 0.0
        %473 = vmatpush1.msra.mxu0 %v355
        %474 = vmatprep.subr.mxu0 0.0
        %475 = vmatpush1.msra.mxu0 %v354
        %476 = vmatprep.subr.mxu0 0.0
        %477 = vmatpush1.msra.mxu0 %v353
        %478 = vmatprep.subr.mxu0 0.0
        %479 = vmatpush1.msra.mxu0 %v352
        %480 = vmatprep.subr.mxu0 0.0
        %481 = vmatpush1.msra.mxu0 %v351
        %482 = vmatprep.subr.mxu0 0.0
        %483 = vmatpush1.msra.mxu0 %v350
        %484 = vmatprep.subr.mxu0 0.0
        %485 = vmatpush2.msra.mxu0 0.0
        %486 = vmatprep.subr.mxu0 0.0
        %487 = vmatpush2.msra.mxu0 0.0
        %488 = vmatprep.subr.mxu0 0.0
        %489 = vmatpush2.msra.mxu0 0.0
        %490 = vmatprep.subr.mxu0 0.0
        %491 = vmatpush2.msra.mxu0 0.0
        %492 = vmatprep.subr.mxu0 0.0
        %493 = vmatpush2.msra.mxu0 0.0
        %494 = vmatprep.subr.mxu0 0.0
        %495 = vmatpush2.msra.mxu0 0.0
        %496 = vmatprep.subr.mxu0 0.0
        %497 = vmatpush2.msra.mxu0 0.0
        %498 = vmatprep.subr.mxu0 0.0
        %499 = vmatpush2.msra.mxu0 0.0
        %500 = vmatprep.subr.mxu0 0.0
        %501 = vmatpush2.msra.mxu0 0.0
        %502 = vmatprep.subr.mxu0 0.0
        %503 = vmatpush2.msra.mxu0 0.0
        %504 = vmatprep.subr.mxu0 0.0
        %505 = vmatpush2.msra.mxu0 0.0
        %506 = vmatprep.subr.mxu0 0.0
        %507 = vmatpush2.msra.mxu0 0.0
        %508 = vmatprep.subr.mxu0 0.0
        %509 = vmatpush2.msra.mxu0 0.0
        %510 = vmatprep.subr.mxu0 0.0
        %511 = vmatpush2.msra.mxu0 0.0
        %512 = vmatprep.subr.mxu0 0.0
        %513 = vmatpush2.msra.mxu0 0.0
        %514 = vmatprep.subr.mxu0 0.0
        %515 = vmatpush2.msra.mxu0 0.0
        %516 = vmatprep.mubr.f32.mxu0 0.0
        %517 = vmatmul.mubr.f32.gmra.mxu0 %v348
        %v518 = vpop.f32.mrf.mxu0
        %v519 = vadd.f32 %v449, %v518
        %v520 = vpop.f32.mrf.mxu0
        %521 = vdwg.mxu0
        %v522 = vld [vmem:[%s347] sm:$0x1]
        %v524 = vlaneseq
        %v525 = vshrl.u32 %v524, 7
        %v526 = vsub.s32 0, %v525
        %v527 = vrot.slane %v522, %v526
        %v529 = vadd.f32 %v519, %v527
        %v530 = vxor.u32 %v529, 2147483648
        %v531 = vmul.f32 %v530, 1.442695
        %v532 = vpow.pop %v531
        %v533 = vadd.f32 %v532, 1.0
        %v534 = vrcp.pop %v533
        %v535 = vmul.f32 1.0, %v534
        %v536 = vmul.f32 %v348, %v535
        %v537 = vadd.f32 %v536, %v349
        %538 = vst [vmem:[%s344] sm:$0xff] %v537
        %s539 = sand.u32 %s178, 1
        %s540 = scalar_lea.sflag [#allocation4], %s539
        %s541 = sand.u32 %s178, 1
        %s542 = smul.addr %s541, 8
        %s543 = scalar_lea.vmem [#allocation10], %s542
        // Predicated region
        $region57: #{tpu_custom_call.1} parent=39 // pred_check
          %p544 = pneg %p188
        $region58: #{tpu_custom_call.1} parent=39 // pred_check_branch
          %546 = sbr.rel (%p544) target = $region60
        $region59: #{tpu_custom_call.1} parent=39 // pred_region
          %s548 = ssub.s32 128, 128
          %549 = vsyncadd %s540, %s548
          %s550 = sadd.s32 %s30, %s31
          %s551 = smul.addr %s550, 128
          %s552 = scalar_lea.hbm %s5, %s551
          %s554 = sshll.u32 %s543, 4
          %s555 = int_to_ptr.vmem [resolvable:$true] %s554
          %557 = dma.vmem_to_hbm [thread:$0]  %s555, 128, %s552, %s540
        $region60: #{tpu_custom_call.1} parent=39 // pred_fallthru
          _
      $region40: #{tpu_custom_call.1} parent=5 // pred_fallthru
        _
      %p558 = scmp.le.s32.totalorder 2, %s21
      // Predicated region
      $region61: #{tpu_custom_call.1} parent=5 // pred_check
        %p559 = pneg %p558
      $region62: #{tpu_custom_call.1} parent=5 // pred_check_branch
        %561 = sbr.rel (%p559) target = $region64
      $region63: #{tpu_custom_call.1} parent=5 // pred_region
        %s562 = ssub.s32 %s21, 2
        // Predicated region
        $region65: #{tpu_custom_call.1} parent=63 // pred_check
          %p563 = pneg %p194
        $region66: #{tpu_custom_call.1} parent=63 // pred_check_branch
          %565 = sbr.rel (%p563) target = $region68
        $region67: #{tpu_custom_call.1} parent=63 // pred_region
          %s566 = sand.u32 %s179, 1
          %s567 = scalar_lea.sflag [#allocation4], %s566
          %s568 = sand.u32 %s179, 1
          %s569 = smul.addr %s568, 8
          %s570 = scalar_lea.vmem [#allocation10], %s569
          %571 = dma.done %s567, 128
        $region68: #{tpu_custom_call.1} parent=63 // pred_fallthru
          _
      $region64: #{tpu_custom_call.1} parent=5 // pred_fallthru
        _
    $region6: #{tpu_custom_call.1} parent=1 // loop_footer
      %s25 = sadd.s32 1, %s21
    $region7: #{tpu_custom_call.1} parent=1 // loop_footer_branch
      %20 = sbr.rel target = $region3
    $region8: #{tpu_custom_call.1} parent=1 // loop_exit
      _
    %572 = vsyncpa [#allocation3], 1
    %s573 = scalar_lea.sflag [#allocation3], 1
    %574 = vsyncpa %s573, 1
    %575 = vsyncpa [#allocation6], 1
    %s576 = scalar_lea.sflag [#allocation6], 1
    %577 = vsyncpa %s576, 1
    %578 = vsyncpa [#allocation9], 1
    %579 = vsyncpa [#allocation4], 1
    %s580 = scalar_lea.sflag [#allocation4], 1
    %581 = vsyncpa %s580, 1

</llo_original>
